<compile_context>
chip_gen: v5e
topology: v5e:2x2
jax: 0.10.0
libtpu: 0.0.40
codegen_flags: <defaults>
</compile_context>

<pallas_src>
import functools
import math

import jax
import jax.numpy as jnp
from jax.experimental import pallas as pl
from jax.experimental.pallas import tpu as pltpu

MIB = 1024 * 1024
LANE = 128


def _rup(v, m):
    return (v + m - 1) // m * m


def _vmem_capacity_bytes():
    """Physical VMEM of the local TPU; conservative (v7x) fallback."""
    try:
        cap = int(pltpu.get_tpu_info().vmem_capacity_bytes)
        if cap > 0:
            return cap
    except Exception:
        pass
    return 64 * MIB


def _const_block_spec(shape):
    """Whole-array block whose index never changes: single-buffer it.

    Returns (spec, buffer_count) so the VMEM budget matches what was granted.
    """
    idx = lambda r: (0,) * len(shape)
    try:
        return pl.BlockSpec(shape, idx, pipeline_mode=pl.Buffered(1)), 1
    except Exception:  # older jax without pipeline_mode: default double-buffer
        return pl.BlockSpec(shape, idx), 2


def _choose_rows_per_step(rows, W, rows_cap, sub_pack):
    """Largest divisor of `rows` fitting the VMEM budget (None if impossible).

    Preference order: (1) keep >= 2 grid steps so the DMA pipeline overlaps,
    (2) even grid (balances v7x's two TensorCores under "parallel" semantics),
    (3) dtype-packed sublane tiles, (4) biggest tile (mem-bound op).
    Hard constraint: (tr*W) % 8 == 0 unless the block covers the whole array.
    """
    need = 8 // math.gcd(W, 8)                  # Mosaic (8, 128) tiling rule
    pref = sub_pack // math.gcd(W, sub_pack)    # full dtype-packed vregs
    divs = set()
    d = 1
    while d * d <= rows:
        if rows % d == 0:
            divs.add(d)
            divs.add(rows // d)
        d += 1
    best_score, best_tr = None, None
    for tr in sorted(divs):
        if tr > rows_cap:
            continue
        g = rows // tr
        if g > 1 and tr % need:
            continue
        score = (
            1 if (g >= 2 or rows < 2) else 0,
            1 if (g == 1 or g % 2 == 0) else 0,
            1 if tr % pref == 0 else 0,
            tr,
        )
        if best_score is None or score > best_score:
            best_score, best_tr = score, tr
    return best_tr


def _fused_unpack_kernel(x_ref, w_ref, b_ref, o_ref, *, split_n):
    # x_ref: (tr*W, C)
    # w_ref: (C, N)     columns permuted to (i, j, c) order, N = 2*half
    # b_ref: (1, N)
    # o_ref: (tr, 2, W, half) indexed as (row, i, w, j*c_out + c)
    tr, _, W, half = o_ref.shape
    x = x_ref[...]
    if not split_n:
        lin_full = jnp.dot(x, w_ref[...], preferred_element_type=jnp.float32)
    for i in range(2):
        lo = i * half
        if split_n:
            # Lane-aligned half-N matmul: only half the f32 intermediate is live.
            lin = jnp.dot(x, w_ref[:, lo:lo + half],
                          preferred_element_type=jnp.float32)
        else:
            lin = lin_full[:, lo:lo + half]
        # Bias-add + cast per half right before its store (no full-size temp).
        lin = (lin + b_ref[:, lo:lo + half]).astype(o_ref.dtype)
        # Leading-dim-only reshape (minor dim intact) -> no relayout when W % 8 == 0.
        o_ref[:, i, :, :] = lin.reshape(tr, W, half)


def prepare_patch_unpack_params(weight, bias):
    """One-time parameter prep (hoist out of the per-forward path / cache it).

    Permutes the nn.Linear weight rows from channel order (c, i, j) to
    (i, j, c) so the kernel's matmul output maps directly onto the
    pixel-shuffled memory layout.  Cast to bf16 here if desired.

    Args:
      weight: (4*C_out, C)  PyTorch nn.Linear weight.
      bias:   (4*C_out,)
    Returns:
      w_perm: (C, 4*C_out), b_perm: (1, 4*C_out)
    """
    N, C = weight.shape
    c_out = N // 4
    w_perm = jnp.transpose(
        weight.reshape(c_out, 2, 2, C).transpose(1, 2, 0, 3).reshape(N, C))
    b_perm = bias.reshape(c_out, 2, 2).transpose(1, 2, 0).reshape(1, N)
    return w_perm, b_perm


def patch_unpack_2d(x, w_perm, b_perm):
    """PatchUnpack2D forward (channel_first=False).

    Args:
      x:      (B, H, W, C) channel-last input.
      w_perm: (C, 4*C_out) permuted weight from prepare_patch_unpack_params.
      b_perm: (1, 4*C_out) permuted bias.
    Returns:
      (B, 2H, 2W, C_out)
    """
    B, H, W, C = x.shape
    N = w_perm.shape[1]                  # 4 * c_out
    c_out = N // 4
    half = 2 * c_out
    rows = B * H
    itemsize = jnp.dtype(x.dtype).itemsize
    sub_pack = max(8, 32 // itemsize)    # 8 f32 / 16 bf16 / 32 int8 sublane pack
    split_n = (half % LANE == 0)         # lane-aligned weight column split
    inter_cols = half if split_n else N  # live f32 matmul-result columns

    # --- generation-aware VMEM budget (v7x: 64 MiB, v5e/v6e: 128 MiB) ---
    vmem_cap = _vmem_capacity_bytes()
    if vmem_cap <= 64 * MIB:
        vmem_target, vmem_clamp = 44 * MIB, 56 * MIB      # leave compiler headroom
    else:
        vmem_target, vmem_clamp = 96 * MIB, 112 * MIB

    # Constant (weight / bias) blocks: single-buffered.
    w_spec, w_bufs = _const_block_spec((C, N))
    b_spec, b_bufs = _const_block_spec((1, N))
    w_bytes = w_bufs * _rup(C, sub_pack) * _rup(N, LANE) * itemsize
    b_bytes = b_bufs * sub_pack * _rup(N, LANE) * itemsize

    # VMEM bytes per (b, h)-row of a grid step: x & out double-buffered, plus
    # the float32 matmul intermediate (previously unbudgeted).
    x_row = 2 * W * _rup(C, LANE) * itemsize
    o_row = 2 * 2 * W * _rup(half, LANE) * itemsize
    f32_row = W * _rup(inter_cols, LANE) * 4
    row_bytes = x_row + o_row + f32_row
    rows_cap = max(1, int((vmem_target - w_bytes - b_bytes - 2 * MIB) // row_bytes))

    # --- tile selection: divisor of rows => no padding, no output slice ---
    tr = _choose_rows_per_step(rows, W, rows_cap, sub_pack)
    if tr is not None:
        rows_p, pad_rows = rows, 0
    else:
        # Rare fallback: pad rows (costs an extra HBM pass over x and the output).
        need = 8 // math.gcd(W, 8)
        tr = max(need, (min(rows_cap, rows) // need) * need)
        rows_p = _rup(rows, tr)
        pad_rows = rows_p - rows
    grid = rows_p // tr

    # --- inputs as contiguous views (pad only in the fallback) ---
    x3 = x.reshape(rows, W, C)
    if pad_rows:
        x3 = jnp.pad(x3, ((0, pad_rows), (0, 0), (0, 0)))
    x2 = x3.reshape(rows_p * W, C)

    # --- explicit VMEM limit for the chosen tile ---
    x_tile = 2 * _rup(tr * W, sub_pack) * _rup(C, LANE) * itemsize
    o_tile = 2 * tr * 2 * _rup(W, sub_pack) * _rup(half, LANE) * itemsize
    f32_tile = _rup(tr * W, sub_pack) * _rup(inter_cols, LANE) * 4
    vmem_limit = int(1.25 * (x_tile + o_tile + w_bytes + b_bytes + f32_tile)) + 2 * MIB
    vmem_limit = min(max(vmem_limit, 32 * MIB), vmem_clamp)

    m_total = rows_p * W
    cost = pl.CostEstimate(
        flops=2 * m_total * C * N,
        transcendentals=0,
        bytes_accessed=itemsize * (m_total * C + C * N + N + m_total * N),
    )

    # TODO(synk): when half = 2*c_out < 128 or W % 8 != 0 the output minor dim
    # forces masked partial stores; a lane-dense (rows, 2*W*half) output view
    # would densify the store path but needs a minor-dim-merging in-kernel
    # reshape that Mosaic does not reliably support, so it is left out.
    # TODO(synk): on v5e, casting x/w_perm to bf16 (keeping f32 accumulation)
    # would raise MXU throughput and halve x traffic; omitted to keep exact
    # float32 numerics of the PyTorch module.
    out = pl.pallas_call(
        functools.partial(_fused_unpack_kernel, split_n=split_n),
        out_shape=jax.ShapeDtypeStruct((rows_p, 2, W, half), x.dtype),
        grid_spec=pltpu.PrefetchScalarGridSpec(
            num_scalar_prefetch=0,
            grid=(grid,),
            in_specs=[
                pl.BlockSpec((tr * W, C), lambda r: (r, 0)),
                w_spec,
                b_spec,
            ],
            out_specs=pl.BlockSpec((tr, 2, W, half), lambda r: (r, 0, 0, 0)),
        ),
        compiler_params=pltpu.CompilerParams(
            dimension_semantics=("parallel",),
            vmem_limit_bytes=vmem_limit,
        ),
        cost_estimate=cost,
    )(x2, w_perm, b_perm)

    if pad_rows:
        out = out[:rows]                               # fallback path only
    return out.reshape(B, 2 * H, 2 * W, c_out)         # contiguous, zero-cost view


def _reference(x, weight, bias):
    """Pure-JAX reference matching the PyTorch module (channel_last)."""
    lin = jnp.einsum("bhwc,nc->bhwn", x, weight) + bias
    B, H, W, N = lin.shape
    c_out = N // 4
    y = lin.reshape(B, H, W, c_out, 2, 2)
    y = y.transpose(0, 1, 4, 2, 5, 3).reshape(B, 2 * H, 2 * W, c_out)
    return y


if __name__ == "__main__":
    key = jax.random.PRNGKey(0)
    k_x, k_w, k_b = jax.random.split(key, 3)

    B, H, W, dim = 2, 8, 8, 32          # small shapes consistent with the module
    out_features = 4 * dim              # out_dim=-1 -> 4*dim, c_out = dim

    x = jax.random.normal(k_x, (B, H, W, dim), dtype=jnp.float32)
    bound = 1.0 / (dim ** 0.5)
    weight = jax.random.uniform(k_w, (out_features, dim), jnp.float32, -bound, bound)
    bias = jax.random.uniform(k_b, (out_features,), jnp.float32, -bound, bound)

    # One-time parameter prep, hoisted out of the forward path.
    w_perm, b_perm = prepare_patch_unpack_params(weight, bias)

    out = patch_unpack_2d(x, w_perm, b_perm)
    out = jax.block_until_ready(out)

    ref = _reference(x, weight, bias)
    assert out.shape == (B, 2 * H, 2 * W, dim), out.shape
    assert jnp.allclose(out, ref, atol=1e-5, rtol=1e-5)

    print("KERNEL_OK")
</pallas_src>

<mosaic_0001>
module attributes {stable_mosaic.version = 11 : i64} {
  func.func @_fused_unpack_kernel(%arg0: i32, %arg1: memref<64x32xf32, #tpu.memory_space<vmem>>, %arg2: memref<32x128xf32, #tpu.memory_space<vmem>>, %arg3: memref<1x128xf32, #tpu.memory_space<vmem>>, %arg4: memref<8x2x8x64xf32, #tpu.memory_space<vmem>>) attributes {dimension_semantics = [#tpu.dimension_semantics<parallel>], iteration_bounds = array<i64: 2>, scalar_prefetch = 0 : i64, scratch_operands = 0 : i64, tpu.core_type = #tpu.core_type<tc>, window_params = [{transform_indices = @transform_0, window_bounds = array<i64: 64, 32>}, {pipeline_mode = #tpu.pipeline_mode<synchronous>, transform_indices = @transform_1, window_bounds = array<i64: 32, 128>}, {pipeline_mode = #tpu.pipeline_mode<synchronous>, transform_indices = @transform_2, window_bounds = array<i64: 1, 128>}, {transform_indices = @transform_3, window_bounds = array<i64: 8, 2, 8, 64>}]} {
    %c0 = arith.constant 0 : index
    %c0_0 = arith.constant 0 : index
    %0 = vector.load %arg1[%c0, %c0_0] : memref<64x32xf32, #tpu.memory_space<vmem>>, vector<64x32xf32>
    %c0_1 = arith.constant 0 : index
    %c0_2 = arith.constant 0 : index
    %1 = vector.load %arg2[%c0_1, %c0_2] : memref<32x128xf32, #tpu.memory_space<vmem>>, vector<32x128xf32>
    %cst = arith.constant dense<0.000000e+00> : vector<64x128xf32>
    %2 = tpu.matmul %0, %1, %cst {dimension_numbers = #tpu.dot_dimension_numbers<[1], [0], [0], [1], [0, 0, 1, 1], [], []>} : vector<64x32xf32>, vector<32x128xf32>, vector<64x128xf32> -> vector<64x128xf32>
    %3 = vector.extract_strided_slice %2 {offsets = [0, 0], sizes = [64, 64], strides = [1, 1]} : vector<64x128xf32> to vector<64x64xf32>
    %c0_3 = arith.constant 0 : index
    %c0_4 = arith.constant 0 : index
    %4 = vector.load %arg3[%c0_3, %c0_4] : memref<1x128xf32, #tpu.memory_space<vmem>>, vector<1x64xf32>
    %5 = vector.broadcast %4 : vector<1x64xf32> to vector<64x64xf32>
    %6 = arith.addf %3, %5 : vector<64x64xf32>
    %7 = vector.shape_cast %6 : vector<64x64xf32> to vector<8x8x64xf32>
    %c0_5 = arith.constant 0 : index
    %c0_6 = arith.constant 0 : index
    %c0_7 = arith.constant 0 : index
    %c0_8 = arith.constant 0 : index
    %8 = vector.load %arg4[%c0_5, %c0_6, %c0_7, %c0_8] : memref<8x2x8x64xf32, #tpu.memory_space<vmem>>, vector<8x1x8x64xf32>
    %9 = vector.shape_cast %8 : vector<8x1x8x64xf32> to vector<8x8x64xf32>
    %10 = vector.shape_cast %7 : vector<8x8x64xf32> to vector<8x1x8x64xf32>
    tpu.vector_store %arg4[%c0_5, %c0_6, %c0_7, %c0_8], %10 {strides = array<i32>} : memref<8x2x8x64xf32, #tpu.memory_space<vmem>>, vector<8x1x8x64xf32>,
    %11 = vector.extract_strided_slice %2 {offsets = [0, 64], sizes = [64, 64], strides = [1, 1]} : vector<64x128xf32> to vector<64x64xf32>
    %c0_9 = arith.constant 0 : index
    %c64 = arith.constant 64 : index
    %12 = vector.load %arg3[%c0_9, %c64] : memref<1x128xf32, #tpu.memory_space<vmem>>, vector<1x64xf32>
    %13 = vector.broadcast %12 : vector<1x64xf32> to vector<64x64xf32>
    %14 = arith.addf %11, %13 : vector<64x64xf32>
    %15 = vector.shape_cast %14 : vector<64x64xf32> to vector<8x8x64xf32>
    %c0_10 = arith.constant 0 : index
    %c1 = arith.constant 1 : index
    %c0_11 = arith.constant 0 : index
    %c0_12 = arith.constant 0 : index
    %16 = vector.load %arg4[%c0_10, %c1, %c0_11, %c0_12] : memref<8x2x8x64xf32, #tpu.memory_space<vmem>>, vector<8x1x8x64xf32>
    %17 = vector.shape_cast %16 : vector<8x1x8x64xf32> to vector<8x8x64xf32>
    %18 = vector.shape_cast %15 : vector<8x8x64xf32> to vector<8x1x8x64xf32>
    tpu.vector_store %arg4[%c0_10, %c1, %c0_11, %c0_12], %18 {strides = array<i32>} : memref<8x2x8x64xf32, #tpu.memory_space<vmem>>, vector<8x1x8x64xf32>,
    return
  }
  func.func @transform_0(%arg0: i32) -> (i32, i32) {
    %c0_i32 = arith.constant 0 : i32
    %c0_i32_0 = arith.constant 0 : i32
    return %arg0, %c0_i32 : i32, i32
  }
  func.func @transform_1(%arg0: i32) -> (i32, i32) {
    %c0_i32 = arith.constant 0 : i32
    %c0_i32_0 = arith.constant 0 : i32
    %c0_i32_1 = arith.constant 0 : i32
    return %c0_i32, %c0_i32_0 : i32, i32
  }
  func.func @transform_2(%arg0: i32) -> (i32, i32) {
    %c0_i32 = arith.constant 0 : i32
    %c0_i32_0 = arith.constant 0 : i32
    %c0_i32_1 = arith.constant 0 : i32
    return %c0_i32, %c0_i32_0 : i32, i32
  }
  func.func @transform_3(%arg0: i32) -> (i32, i32, i32, i32) {
    %c0_i32 = arith.constant 0 : i32
    %c0_i32_0 = arith.constant 0 : i32
    %c0_i32_1 = arith.constant 0 : i32
    %c0_i32_2 = arith.constant 0 : i32
    return %arg0, %c0_i32, %c0_i32_0, %c0_i32_1 : i32, i32, i32, i32
  }
}

</mosaic_0001>

<llo_original>
// kernel: tpu_custom_call.1
$region0: #{tpu_custom_call.1}
  #allocation0 [shape = 'u32[]', space=smem, size = 0x4, offset = 0x4, fixed_abs, tag = 'smem constant byte address 0x4 - core index']
  #allocation1 [shape = 'u32[72,128]{1,0:T(1,128)}', space=vmem, size = 0x9000, scoped, tag = 'internal scratch']
  %s0 = inlined_call_operand.vmem [shape: f32[128,32], index: 0, kind: input, shape index: {}]
  %s1 = inlined_call_operand.vmem [shape: f32[32,128], index: 1, kind: input, shape index: {}]
  %s2 = inlined_call_operand.vmem [shape: f32[1,128], index: 2, kind: input, shape index: {}]
  %s3 = inlined_call_operand.hbm [shape: f32[16,2,8,64], index: 3, kind: output, shape index: {}]
  %s4 = sld [smem:[#allocation0]]
  $region45: #{tpu_custom_call.1} parent=0
    _
  %s6 = ssub.s32 1, %s4
  %s7 = scalar_select 0, %s6, %s4
  $region1: #{tpu_custom_call.1} parent=0
    #allocation2 [shape = 'u8[131072]{0}', space=vmem, size = 0x20000, scoped, tag = 'output window, operand 0']
    #allocation3 [shape = 's32[2]{0}', space=sflag, size = 0x8, scoped, tag = 'scoped memory for tpu_custom_call.1']
    %8 = vsyncpa [#allocation3], 0
    %s9 = scalar_lea.sflag [#allocation3], 1
    %10 = vsyncpa %s9, 0
    loop: start=0, step=1, limit=4
    $region2: #{tpu_custom_call.1} parent=1 // loop_pre_header
      _
    $region3: #{tpu_custom_call.1} parent=1 // loop_header
      %s12 = sphi 0, %s16
      %p13 = scmp.ge.s32.totalorder %s12, 4
      %s22 = sphi 0, %s24
      %s25 = sphi 0, %s22
      %s26 = sphi 0, %s25
      %s42 = sphi 0, %s26
      %s46 = sphi 0, %s46
      %s48 = sphi 0, %s46
      %s49 = sphi 0, %s48
      %s63 = sphi 0, %s49
      %s67 = sphi 0, %s67
      %s69 = sphi 0, %s67
      %s70 = sphi 0, %s69
      %s84 = sphi 0, %s70
      %s90 = sphi 0, %s92
      %s93 = sphi 0, %s90
      %s94 = sphi 0, %s93
      %s110 = sphi 0, %s94
    $region4: #{tpu_custom_call.1} parent=1 // loop_header_branch
      %15 = sbr.rel (%p13) target = $region8
    $region5: #{tpu_custom_call.1} parent=1 // loop_body
      %s17 = ssub.s32 %s12, 1
      %s18 = ssub.s32 %s12, 2
      %s19 = sadd.s32 %s12, 1
      %s20 = ssub.s32 %s12, %s19
      %p21 = scmp.eq.s32.totalorder %s20, 0
      %s23 = sadd.s32 %s22, 1
      %s24 = scalar_select %p21, %s22, %s23
      %p27 = pneg %p21
      %p28 = scmp.eq.s32.totalorder %s12, 1
      %p29 = por %p27, %p28
      %p30 = scmp.ne.s32.totalorder %s22, %s25
      %p31 = scmp.eq.s32.totalorder %s12, 0
      %p32 = por %p30, %p31
      %p33 = scmp.ne.s32.totalorder %s22, %s25
      %p34 = scmp.eq.s32.totalorder %s17, 1
      %p35 = por %p33, %p34
      %p36 = scmp.ne.s32.totalorder %s25, %s26
      %p37 = scmp.eq.s32.totalorder %s17, 0
      %p38 = por %p36, %p37
      %p39 = scmp.ne.s32.totalorder %s25, %s26
      %p40 = scmp.eq.s32.totalorder %s18, 1
      %p41 = por %p39, %p40
      %p43 = scmp.ne.s32.totalorder %s26, %s42
      %p44 = scmp.eq.s32.totalorder %s18, 0
      %p45 = por %p43, %p44
      %s47 = sadd.s32 %s46, 1
      %p50 = scmp.eq.s32.totalorder %s12, 1
      %p51 = scmp.ne.s32.totalorder %s46, %s48
      %p52 = scmp.eq.s32.totalorder %s12, 0
      %p53 = por %p51, %p52
      %p54 = scmp.ne.s32.totalorder %s46, %s48
      %p55 = scmp.eq.s32.totalorder %s17, 1
      %p56 = por %p54, %p55
      %p57 = scmp.ne.s32.totalorder %s48, %s49
      %p58 = scmp.eq.s32.totalorder %s17, 0
      %p59 = por %p57, %p58
      %p60 = scmp.ne.s32.totalorder %s48, %s49
      %p61 = scmp.eq.s32.totalorder %s18, 1
      %p62 = por %p60, %p61
      %p64 = scmp.ne.s32.totalorder %s49, %s63
      %p65 = scmp.eq.s32.totalorder %s18, 0
      %p66 = por %p64, %p65
      %s68 = sadd.s32 %s67, 1
      %p71 = scmp.eq.s32.totalorder %s12, 1
      %p72 = scmp.ne.s32.totalorder %s67, %s69
      %p73 = scmp.eq.s32.totalorder %s12, 0
      %p74 = por %p72, %p73
      %p75 = scmp.ne.s32.totalorder %s67, %s69
      %p76 = scmp.eq.s32.totalorder %s17, 1
      %p77 = por %p75, %p76
      %p78 = scmp.ne.s32.totalorder %s69, %s70
      %p79 = scmp.eq.s32.totalorder %s17, 0
      %p80 = por %p78, %p79
      %p81 = scmp.ne.s32.totalorder %s69, %s70
      %p82 = scmp.eq.s32.totalorder %s18, 1
      %p83 = por %p81, %p82
      %p85 = scmp.ne.s32.totalorder %s70, %s84
      %p86 = scmp.eq.s32.totalorder %s18, 0
      %p87 = por %p85, %p86
      %s88 = ssub.s32 %s12, %s19
      %p89 = scmp.eq.s32.totalorder %s88, 0
      %s91 = sadd.s32 %s90, 1
      %s92 = scalar_select %p89, %s90, %s91
      %p95 = pneg %p89
      %p96 = scmp.eq.s32.totalorder %s12, 1
      %p97 = por %p95, %p96
      %p98 = scmp.ne.s32.totalorder %s90, %s93
      %p99 = scmp.eq.s32.totalorder %s12, 0
      %p100 = por %p98, %p99
      %p101 = scmp.ne.s32.totalorder %s90, %s93
      %p102 = scmp.eq.s32.totalorder %s17, 1
      %p103 = por %p101, %p102
      %p104 = scmp.ne.s32.totalorder %s93, %s94
      %p105 = scmp.eq.s32.totalorder %s17, 0
      %p106 = por %p104, %p105
      %p107 = scmp.ne.s32.totalorder %s93, %s94
      %p108 = scmp.eq.s32.totalorder %s18, 1
      %p109 = por %p107, %p108
      %p111 = scmp.ne.s32.totalorder %s94, %s110
      %p112 = scmp.eq.s32.totalorder %s18, 0
      %p113 = por %p111, %p112
      %p114 = scmp.le.s32.totalorder 1, %s12
      %p115 = scmp.lt.s32.totalorder %s12, 3
      %p116 = pnand %p114, %p115
      %p117 = pneg %p116
      // Predicated region
      $region9: #{tpu_custom_call.1} parent=5 // pred_check
        _
      $region10: #{tpu_custom_call.1} parent=5 // pred_check_branch
        %119 = sbr.rel (%p116) target = $region12
      $region11: #{tpu_custom_call.1} parent=5 // pred_region
        %s120 = ssub.s32 %s12, 1
        // Predicated region
        $region13: #{tpu_custom_call.1} parent=11 // pred_check
          %p121 = pneg %p59
        $region14: #{tpu_custom_call.1} parent=11 // pred_check_branch
          %123 = sbr.rel (%p121) target = $region16
        $region15: #{tpu_custom_call.1} parent=11 // pred_region
          _
        $region16: #{tpu_custom_call.1} parent=11 // pred_fallthru
          _
        // Predicated region
        $region17: #{tpu_custom_call.1} parent=11 // pred_check
          %p124 = pneg %p80
        $region18: #{tpu_custom_call.1} parent=11 // pred_check_branch
          %126 = sbr.rel (%p124) target = $region20
        $region19: #{tpu_custom_call.1} parent=11 // pred_region
          _
        $region20: #{tpu_custom_call.1} parent=11 // pred_fallthru
          _
      $region12: #{tpu_custom_call.1} parent=5 // pred_fallthru
        _
      %p127 = scmp.lt.s32.totalorder %s12, 2
      // Predicated region
      $region21: #{tpu_custom_call.1} parent=5 // pred_check
        %p128 = pneg %p127
      $region22: #{tpu_custom_call.1} parent=5 // pred_check_branch
        %130 = sbr.rel (%p128) target = $region24
      $region23: #{tpu_custom_call.1} parent=5 // pred_region
        // Predicated region
        $region25: #{tpu_custom_call.1} parent=23 // pred_check
          %p131 = pneg %p32
        $region26: #{tpu_custom_call.1} parent=23 // pred_check_branch
          %133 = sbr.rel (%p131) target = $region28
        $region27: #{tpu_custom_call.1} parent=23 // pred_region
          %s134 = smul.u32 8, %s12
          %p135 = scmp.lt.s32.totalorder %s134, 15
          %s136 = scalar_select %p135, %s134, 15
          %s137 = smul.addr %s136, 8
          %s138 = scalar_lea.vmem %s0, %s137
          %s139 = smul.u32 8, %s12
        $region28: #{tpu_custom_call.1} parent=23 // pred_fallthru
          _
      $region24: #{tpu_custom_call.1} parent=5 // pred_fallthru
        _
      %p140 = scmp.le.s32.totalorder 1, %s12
      %p141 = scmp.lt.s32.totalorder %s12, 3
      %p142 = pnand %p140, %p141
      %p143 = pneg %p142
      // Predicated region
      $region29: #{tpu_custom_call.1} parent=5 // pred_check
        _
      $region30: #{tpu_custom_call.1} parent=5 // pred_check_branch
        %145 = sbr.rel (%p142) target = $region32
      $region31: #{tpu_custom_call.1} parent=5 // pred_region
        %s146 = ssub.s32 %s12, 1
        %s147 = smul.u32 8, %s17
        %p148 = scmp.lt.s32.totalorder %s147, 15
        %s149 = scalar_select %p148, %s147, 15
        %s150 = smul.addr %s149, 8
        %s151 = scalar_lea.vmem %s0, %s150
        %p152 = pneg %p38
        %p153 = pneg %p35
        %p154 = pneg %p59
        %p155 = pneg %p56
        %p156 = pneg %p80
        %p157 = pneg %p77
        %p158 = pneg %p106
        %p159 = pneg %p103
        %s160 = sand.u32 %s93, 1
        %s161 = scalar_lea.sflag [#allocation3], %s160
        %s162 = sand.u32 %s93, 1
        %s163 = smul.addr %s162, 128
        %s164 = scalar_lea.vmem [#allocation2], %s163
        %s165 = smul.u32 8, %s17
        %p166 = scmp.lt.s32.totalorder %s165, 15
        %s167 = scalar_select %p166, %s165, 15
        %s168 = smul.addr %s167, 8
        %s169 = scalar_lea.vmem %s0, %s168
        %s170 = smul.u32 8, %s17
        %s171 = smul.u32 8, %s17
        %v172 = vld [vmem:[%s169] sm:$0xff]
        %v173 = vld [vmem:[%s169 + $0x8] sm:$0xff]
        %v174 = vld [vmem:[%s169 + $0x10] sm:$0xff]
        %v175 = vld [vmem:[%s169 + $0x18] sm:$0xff]
        %v176 = vld [vmem:[%s169 + $0x20] sm:$0xff]
        %v177 = vld [vmem:[%s169 + $0x28] sm:$0xff]
        %v178 = vld [vmem:[%s169 + $0x30] sm:$0xff]
        %v179 = vld [vmem:[%s169 + $0x38] sm:$0xff]
        %v180 = vld [vmem:[%s1] sm:$0xff]
        %v181 = vld [vmem:[%s1 + $0x8] sm:$0xff]
        %v182 = vld [vmem:[%s1 + $0x10] sm:$0xff]
        %v183 = vld [vmem:[%s1 + $0x18] sm:$0xff]
        %vm184 = vcmask 261120
        %v186 = vsel %vm184, %v172, 0
        %v189 = vsel %vm184, %v173, 0
        %v192 = vsel %vm184, %v174, 0
        %v195 = vsel %vm184, %v175, 0
        %v198 = vsel %vm184, %v176, 0
        %v201 = vsel %vm184, %v177, 0
        %v204 = vsel %vm184, %v178, 0
        %v207 = vsel %vm184, %v179, 0
        %209 = vmatpush.msra.mxu0 0.0
        %210 = vmatpush.msra.mxu0 0.0
        %211 = vmatpush.msra.mxu0 0.0
        %212 = vmatpush.msra.mxu0 0.0
        %213 = vmatpush.msra.mxu0 0.0
        %214 = vmatpush.msra.mxu0 0.0
        %215 = vmatpush.msra.mxu0 0.0
        %216 = vmatpush.msra.mxu0 0.0
        %217 = vmatpush.msra.mxu0 0.0
        %218 = vmatpush.msra.mxu0 0.0
        %219 = vmatpush.msra.mxu0 0.0
        %220 = vmatpush.msra.mxu0 0.0
        %221 = vmatpush.msra.mxu0 %v183
        %222 = vmatpush.msra.mxu0 %v182
        %223 = vmatpush.msra.mxu0 %v181
        %224 = vmatpush.msra.mxu0 %v180
        %225 = vmatmul.f32.gmra.mxu0 %v186
        %v226 = vpop.f32.mrf.mxu0
        %v227 = vadd.f32 0.0, %v226
        %228 = vmatmul.f32.gmra.mxu0 %v189
        %v229 = vpop.f32.mrf.mxu0
        %v230 = vadd.f32 0.0, %v229
        %231 = vmatmul.f32.gmra.mxu0 %v192
        %v232 = vpop.f32.mrf.mxu0
        %v233 = vadd.f32 0.0, %v232
        %234 = vmatmul.f32.gmra.mxu0 %v195
        %v235 = vpop.f32.mrf.mxu0
        %v236 = vadd.f32 0.0, %v235
        %237 = vmatmul.f32.gmra.mxu0 %v198
        %v238 = vpop.f32.mrf.mxu0
        %v239 = vadd.f32 0.0, %v238
        %240 = vmatmul.f32.gmra.mxu0 %v201
        %v241 = vpop.f32.mrf.mxu0
        %v242 = vadd.f32 0.0, %v241
        %243 = vmatmul.f32.gmra.mxu0 %v204
        %v244 = vpop.f32.mrf.mxu0
        %v245 = vadd.f32 0.0, %v244
        %246 = vmatmul.f32.gmra.mxu0 %v207
        %v247 = vpop.f32.mrf.mxu0
        %v248 = vadd.f32 0.0, %v247
        %249 = vdwg.mxu0
        %v250 = vld [vmem:[%s2] sm:$0x1]
        %v252 = vperm.slane %v250, 0
        %v254 = vadd.f32 %v227, %v252
        %v255 = vadd.f32 %v230, %v252
        %v256 = vadd.f32 %v233, %v252
        %v257 = vadd.f32 %v236, %v252
        %v258 = vadd.f32 %v239, %v252
        %v259 = vadd.f32 %v242, %v252
        %v260 = vadd.f32 %v245, %v252
        %v261 = vadd.f32 %v248, %v252
        %vm262 = vcmask 523264
        %263 = vst.msk [vmem:[%s164] sm:$0xff] %vm262, %v254
        %264 = vst.msk [vmem:[%s164 + $0x10] sm:$0xff] %vm262, %v255
        %265 = vst.msk [vmem:[%s164 + $0x20] sm:$0xff] %vm262, %v256
        %266 = vst.msk [vmem:[%s164 + $0x30] sm:$0xff] %vm262, %v257
        %267 = vst.msk [vmem:[%s164 + $0x40] sm:$0xff] %vm262, %v258
        %268 = vst.msk [vmem:[%s164 + $0x50] sm:$0xff] %vm262, %v259
        %269 = vst.msk [vmem:[%s164 + $0x60] sm:$0xff] %vm262, %v260
        %270 = vst.msk [vmem:[%s164 + $0x70] sm:$0xff] %vm262, %v261
        %v271 = vld [vmem:[%s2] sm:$0x1]
        %v273 = vperm.slane %v271, 0
        %v275 = vadd.f32 %v227, %v273
        %v276 = vadd.f32 %v230, %v273
        %v277 = vadd.f32 %v233, %v273
        %v278 = vadd.f32 %v236, %v273
        %v279 = vadd.f32 %v239, %v273
        %v280 = vadd.f32 %v242, %v273
        %v281 = vadd.f32 %v245, %v273
        %v282 = vadd.f32 %v248, %v273
        %291 = vrot.lane.b32.xlu0 %v275, 64
        %v292 = vpop.permute.xlu0 %291
        %293 = vrot.lane.b32.xlu0 %v276, 64
        %v294 = vpop.permute.xlu0 %293
        %295 = vrot.lane.b32.xlu0 %v277, 64
        %v296 = vpop.permute.xlu0 %295
        %297 = vrot.lane.b32.xlu0 %v278, 64
        %v298 = vpop.permute.xlu0 %297
        %299 = vrot.lane.b32.xlu0 %v279, 64
        %v300 = vpop.permute.xlu0 %299
        %301 = vrot.lane.b32.xlu0 %v280, 64
        %v302 = vpop.permute.xlu0 %301
        %303 = vrot.lane.b32.xlu0 %v281, 64
        %v304 = vpop.permute.xlu0 %303
        %305 = vrot.lane.b32.xlu0 %v282, 64
        %v306 = vpop.permute.xlu0 %305
        %s315 = scalar_lea.vmem %s164, 8 [#allocation2]
        %316 = vst.msk [vmem:[%s315] sm:$0xff] %vm262, %v292
        %317 = vst.msk [vmem:[%s315 + $0x10] sm:$0xff] %vm262, %v294
        %318 = vst.msk [vmem:[%s315 + $0x20] sm:$0xff] %vm262, %v296
        %319 = vst.msk [vmem:[%s315 + $0x30] sm:$0xff] %vm262, %v298
        %320 = vst.msk [vmem:[%s315 + $0x40] sm:$0xff] %vm262, %v300
        %321 = vst.msk [vmem:[%s315 + $0x50] sm:$0xff] %vm262, %v302
        %322 = vst.msk [vmem:[%s315 + $0x60] sm:$0xff] %vm262, %v304
        %323 = vst.msk [vmem:[%s315 + $0x70] sm:$0xff] %vm262, %v306
        %s324 = sand.u32 %s93, 1
        %s325 = scalar_lea.sflag [#allocation3], %s324
        %s326 = sand.u32 %s93, 1
        %s327 = smul.addr %s326, 128
        %s328 = scalar_lea.vmem [#allocation2], %s327
        // Predicated region
        $region33: #{tpu_custom_call.1} parent=31 // pred_check
          %p329 = pneg %p103
        $region34: #{tpu_custom_call.1} parent=31 // pred_check_branch
          %331 = sbr.rel (%p329) target = $region36
        $region35: #{tpu_custom_call.1} parent=31 // pred_region
          %s332 = smul.u32 8, %s17
          %334 = vsyncadd %s325, 0
          %s335 = smul.addr %s332, 2
          %s336 = smul.addr %s335, 8
          %s337 = scalar_lea.hbm %s3, %s336
          %s338 = sshll.u32 %s328, 4
          %s339 = int_to_ptr.vmem [resolvable:$true] %s338
          %s340 = sshll.u32 %s337, 4
          %s341 = int_to_ptr.hbm [resolvable:$true] %s340
          %346 = dma.vmem_to_hbm [thread:$0]  %s339, 2048, %s341, %s325, 128, 128, 8
        $region36: #{tpu_custom_call.1} parent=31 // pred_fallthru
          _
      $region32: #{tpu_custom_call.1} parent=5 // pred_fallthru
        _
      %p347 = scmp.le.s32.totalorder 2, %s12
      // Predicated region
      $region37: #{tpu_custom_call.1} parent=5 // pred_check
        %p348 = pneg %p347
      $region38: #{tpu_custom_call.1} parent=5 // pred_check_branch
        %350 = sbr.rel (%p348) target = $region40
      $region39: #{tpu_custom_call.1} parent=5 // pred_region
        %s351 = ssub.s32 %s12, 2
        // Predicated region
        $region41: #{tpu_custom_call.1} parent=39 // pred_check
          %p352 = pneg %p109
        $region42: #{tpu_custom_call.1} parent=39 // pred_check_branch
          %354 = sbr.rel (%p352) target = $region44
        $region43: #{tpu_custom_call.1} parent=39 // pred_region
          %s355 = sand.u32 %s94, 1
          %s356 = scalar_lea.sflag [#allocation3], %s355
          %s357 = sand.u32 %s94, 1
          %s358 = smul.addr %s357, 128
          %s359 = scalar_lea.vmem [#allocation2], %s358
          %361 = dma.done %s356, 2048
        $region44: #{tpu_custom_call.1} parent=39 // pred_fallthru
          _
      $region40: #{tpu_custom_call.1} parent=5 // pred_fallthru
        _
    $region6: #{tpu_custom_call.1} parent=1 // loop_footer
      %s16 = sadd.s32 1, %s12
    $region7: #{tpu_custom_call.1} parent=1 // loop_footer_branch
      %11 = sbr.rel target = $region3
    $region8: #{tpu_custom_call.1} parent=1 // loop_exit
      _
    %362 = vsyncpa [#allocation3], 1
    %s363 = scalar_lea.sflag [#allocation3], 1
    %364 = vsyncpa %s363, 1

</llo_original>
